<compile_context>
chip_gen: v5e
topology: v5e:2x2
jax: 0.10.0
libtpu: 0.0.40
codegen_flags: <defaults>
</compile_context>

<pallas_src>
import functools

import jax
import jax.numpy as jnp
from jax import lax
from jax.experimental import pallas as pl
from jax.experimental.pallas import tpu as pltpu

MARGIN = 1.0
EPS = 1e-9


def _contrastive_loss_kernel(o1_ref, o2_ref, t_ref, losses_ref, acc_ref, *,
                             margin, eps):
    d_idx = pl.program_id(1)

    @pl.when(d_idx == 0)
    def _():
        acc_ref[...] = jnp.zeros_like(acc_ref)

    # (tile_b, tile_d) f32 squared differences (loaded lane-dense along D).
    diff = o2_ref[...].astype(jnp.float32) - o1_ref[...].astype(jnp.float32)
    sq = diff * diff

    # Row sums presented lane-dense: (1, tile_d) . (tile_b, tile_d)^T
    #   -> (1, tile_b).  The MXU performs the cross-lane reduction, leaving
    # the VPU/EUP work below on fully packed 128-lane vregs.
    ones_row = jnp.ones((1, sq.shape[1]), dtype=jnp.float32)
    acc_ref[...] += lax.dot_general(
        ones_row, sq,
        dimension_numbers=(((1,), (1,)), ((), ())),
        preferred_element_type=jnp.float32)                    # (1, tile_b)

    @pl.when(d_idx == pl.num_programs(1) - 1)
    def _():
        dist = acc_ref[...]                                    # (1, tile_b)
        t = t_ref[...]                                         # (1, tile_b) f32
        hinge = jnp.maximum(margin - jnp.sqrt(dist + eps), 0.0)
        losses_ref[...] = 0.5 * (t * dist + (1.0 - t) * hinge * hinge)


def _select_tiles(B, D, target_block_bytes=2 << 20):
    """Pick (tile_b, tile_d): ~2 MiB f32 input blocks, lane/sublane aligned."""
    bytes_per_row = 4 * D
    rows = target_block_bytes // max(bytes_per_row, 1)

    if rows >= B:
        # Whole problem fits in one ~2 MiB block: full-dim single block.
        return B, D

    if rows >= 128:
        # Full D per block; batch tiled in multiples of 128 rows (lane-dense
        # output blocks) capped so the block stays ~2 MiB.
        return int(min((rows // 128) * 128, 8192)), D

    small_b = B if B <= 128 else 128

    # D too wide for a 128-row full-D block; tile D as a reduction axis when
    # it is lane aligned.  tile_d must divide D exactly so no out-of-bounds
    # garbage columns enter the accumulation.
    if D % 128 == 0:
        max_cols = max(target_block_bytes // (4 * 128), 128)
        tile_d = 128
        for cand in range(128, D + 1, 128):
            if D % cand == 0 and cand <= max_cols:
                tile_d = cand
        return small_b, tile_d

    # TODO(synk): very wide, non-lane-aligned D; fall back to 128-row full-D
    # blocks and a raised VMEM limit.
    return small_b, D


def contrastive_loss(output1, output2, target, size_average=True,
                     margin=MARGIN, eps=EPS, tile_b=None, tile_d=None):
    B, D = output1.shape
    auto_b, auto_d = _select_tiles(B, D)

    if tile_b is None:
        tile_b = auto_b
    if tile_b >= B:
        tile_b = B                                    # single full-dim batch block
    else:
        tile_b = max(128, (tile_b // 128) * 128)      # lane-dense output blocks

    if tile_d is None:
        tile_d = auto_d
    if tile_d >= D or D % tile_d != 0 or tile_d % 128 != 0:
        tile_d = D                                    # no reduction tiling

    nb = pl.cdiv(B, tile_b)
    nd = D // tile_d

    # Cast target once in the wrapper; keep it lane-dense (1, B).
    t_row = target.reshape(1, B).astype(jnp.float32)

    kernel = functools.partial(_contrastive_loss_kernel, margin=margin, eps=eps)

    # Mem-bound cost hint for XLA scheduling around the custom call.
    cost = pl.CostEstimate(
        flops=5 * B * D + 8 * B,
        transcendentals=B,
        bytes_accessed=2 * B * D * 4 + 2 * B * 4,
    )

    # 2 inputs x 2 pipeline buffers x block, plus target/output/accumulator;
    # raise the scoped VMEM limit modestly (covers v5e's lower default, stays
    # well under v7x's 64 MiB physical VMEM).
    vmem_needed = 4 * tile_b * tile_d * 4 + 10 * tile_b * 4
    vmem_limit = int(min(max(2 * vmem_needed, 32 << 20), 48 << 20))

    losses_row = pl.pallas_call(
        kernel,
        out_shape=jax.ShapeDtypeStruct((1, B), jnp.float32),
        grid_spec=pltpu.PrefetchScalarGridSpec(
            num_scalar_prefetch=0,
            grid=(nb, nd),
            in_specs=[
                pl.BlockSpec((tile_b, tile_d), lambda i, k: (i, k)),
                pl.BlockSpec((tile_b, tile_d), lambda i, k: (i, k)),
                pl.BlockSpec((1, tile_b), lambda i, k: (0, i)),
            ],
            out_specs=pl.BlockSpec((1, tile_b), lambda i, k: (0, i)),
            scratch_shapes=[pltpu.VMEM((1, tile_b), jnp.float32)],
        ),
        compiler_params=pltpu.CompilerParams(
            dimension_semantics=("parallel", "arbitrary"),
            vmem_limit_bytes=vmem_limit,
        ),
        cost_estimate=cost,
    )(output1, output2, t_row)

    losses = losses_row[0]                            # exactly B valid entries
    return jnp.mean(losses) if size_average else jnp.sum(losses)


def _reference(output1, output2, target, size_average=True,
               margin=MARGIN, eps=EPS):
    d = jnp.sum((output2 - output1) ** 2, axis=1)
    t = target.astype(jnp.float32)
    hinge = jnp.maximum(margin - jnp.sqrt(d + eps), 0.0)
    losses = 0.5 * (t * d + (1.0 - t) * hinge ** 2)
    return jnp.mean(losses) if size_average else jnp.sum(losses)


if __name__ == "__main__":
    key = jax.random.PRNGKey(0)
    k1, k2, k3, k4, k5, k6, k7, k8, k9 = jax.random.split(key, 9)

    # Small demo shape consistent with the module: a batch of embedding pairs.
    B, D = 16, 32
    output1 = jax.random.normal(k1, (B, D), dtype=jnp.float32)
    output2 = jax.random.normal(k2, (B, D), dtype=jnp.float32)
    target = jax.random.bernoulli(k3, 0.5, (B,)).astype(jnp.int32)

    loss = contrastive_loss(output1, output2, target, size_average=True)
    jax.block_until_ready(loss)
    ref = _reference(output1, output2, target, size_average=True)
    # The in-kernel row-sum runs on the MXU (f32 accumulate; operand path may
    # be multi-pass bf16 depending on generation) -> allow small rel. diff.
    assert jnp.allclose(loss, ref, rtol=1e-3, atol=1e-6), (loss, ref)

    # Multi-block batch path with a partial last tile (B % tile_b != 0).
    B2, D2 = 200, 64
    o1 = jax.random.normal(k4, (B2, D2), dtype=jnp.float32)
    o2 = jax.random.normal(k5, (B2, D2), dtype=jnp.float32)
    tgt = jax.random.bernoulli(k6, 0.5, (B2,)).astype(jnp.int32)
    loss2 = contrastive_loss(o1, o2, tgt, size_average=False, tile_b=128)
    jax.block_until_ready(loss2)
    ref2 = _reference(o1, o2, tgt, size_average=False)
    assert jnp.allclose(loss2, ref2, rtol=1e-3, atol=1e-6), (loss2, ref2)

    # D-tiled (accumulating reduction axis) path.
    B3, D3 = 64, 256
    o1b = jax.random.normal(k7, (B3, D3), dtype=jnp.float32)
    o2b = jax.random.normal(k8, (B3, D3), dtype=jnp.float32)
    tgtb = jax.random.bernoulli(k9, 0.5, (B3,)).astype(jnp.int32)
    loss3 = contrastive_loss(o1b, o2b, tgtb, size_average=True, tile_d=128)
    jax.block_until_ready(loss3)
    ref3 = _reference(o1b, o2b, tgtb, size_average=True)
    assert jnp.allclose(loss3, ref3, rtol=1e-3, atol=1e-6), (loss3, ref3)

    print("KERNEL_OK")
</pallas_src>

<mosaic_0001>
module attributes {stable_mosaic.version = 11 : i64} {
  func.func @_contrastive_loss_kernel(%arg0: i32, %arg1: i32, %arg2: memref<16x32xf32, #tpu.memory_space<vmem>>, %arg3: memref<16x32xf32, #tpu.memory_space<vmem>>, %arg4: memref<1x16xf32, #tpu.memory_space<vmem>>, %arg5: memref<1x16xf32, #tpu.memory_space<vmem>>, %arg6: memref<1x16xf32, #tpu.memory_space<vmem>>) attributes {dimension_semantics = [#tpu.dimension_semantics<parallel>, #tpu.dimension_semantics<arbitrary>], iteration_bounds = array<i64: 1, 1>, scalar_prefetch = 0 : i64, scratch_operands = 1 : i64, tpu.core_type = #tpu.core_type<tc>, window_params = [{transform_indices = @transform_0, window_bounds = array<i64: 16, 32>}, {transform_indices = @transform_1, window_bounds = array<i64: 16, 32>}, {transform_indices = @transform_2, window_bounds = array<i64: 1, 16>}, {transform_indices = @transform_3, window_bounds = array<i64: 1, 16>}]} {
    %c0_i32 = arith.constant 0 : i32
    %0 = arith.cmpi eq, %arg1, %c0_i32 : i32
    %1 = arith.extui %0 : i1 to i32
    %c0_i32_0 = arith.constant 0 : i32
    %2 = arith.cmpi ne, %1, %c0_i32_0 : i32
    scf.if %2 {
      %cst_11 = arith.constant 0.000000e+00 : f32
      %15 = vector.broadcast %cst_11 : f32 to vector<1x16xf32>
      %c0_12 = arith.constant 0 : index
      %c0_13 = arith.constant 0 : index
      %16 = vector.load %arg6[%c0_12, %c0_13] : memref<1x16xf32, #tpu.memory_space<vmem>>, vector<1x16xf32>
      tpu.vector_store %arg6[%c0_12, %c0_13], %15 {strides = array<i32>} : memref<1x16xf32, #tpu.memory_space<vmem>>, vector<1x16xf32>,
    } else {
    }
    %c0 = arith.constant 0 : index
    %c0_1 = arith.constant 0 : index
    %3 = vector.load %arg3[%c0, %c0_1] : memref<16x32xf32, #tpu.memory_space<vmem>>, vector<16x32xf32>
    %c0_2 = arith.constant 0 : index
    %c0_3 = arith.constant 0 : index
    %4 = vector.load %arg2[%c0_2, %c0_3] : memref<16x32xf32, #tpu.memory_space<vmem>>, vector<16x32xf32>
    %5 = arith.subf %3, %4 : vector<16x32xf32>
    %6 = arith.mulf %5, %5 : vector<16x32xf32>
    %cst = arith.constant 1.000000e+00 : f32
    %7 = vector.broadcast %cst : f32 to vector<1x32xf32>
    %c0_4 = arith.constant 0 : index
    %c0_5 = arith.constant 0 : index
    %8 = vector.load %arg6[%c0_4, %c0_5] : memref<1x16xf32, #tpu.memory_space<vmem>>, vector<1x16xf32>
    %cst_6 = arith.constant dense<0.000000e+00> : vector<1x16xf32>
    %9 = tpu.matmul %7, %6, %cst_6 {dimension_numbers = #tpu.dot_dimension_numbers<[1], [1], [0], [0], [0, 0, 1, 0], [], []>} : vector<1x32xf32>, vector<16x32xf32>, vector<1x16xf32> -> vector<1x16xf32>
    %10 = arith.addf %8, %9 : vector<1x16xf32>
    %c0_7 = arith.constant 0 : index
    %c0_8 = arith.constant 0 : index
    %11 = vector.load %arg6[%c0_7, %c0_8] : memref<1x16xf32, #tpu.memory_space<vmem>>, vector<1x16xf32>
    tpu.vector_store %arg6[%c0_7, %c0_8], %10 {strides = array<i32>} : memref<1x16xf32, #tpu.memory_space<vmem>>, vector<1x16xf32>,
    %c0_i32_9 = arith.constant 0 : i32
    %12 = arith.cmpi eq, %arg1, %c0_i32_9 : i32
    %13 = arith.extui %12 : i1 to i32
    %c0_i32_10 = arith.constant 0 : i32
    %14 = arith.cmpi ne, %13, %c0_i32_10 : i32
    scf.if %14 {
      %c0_11 = arith.constant 0 : index
      %c0_12 = arith.constant 0 : index
      %15 = vector.load %arg6[%c0_11, %c0_12] : memref<1x16xf32, #tpu.memory_space<vmem>>, vector<1x16xf32>
      %c0_13 = arith.constant 0 : index
      %c0_14 = arith.constant 0 : index
      %16 = vector.load %arg4[%c0_13, %c0_14] : memref<1x16xf32, #tpu.memory_space<vmem>>, vector<1x16xf32>
      %cst_15 = arith.constant 9.99999971E-10 : f32
      %17 = vector.broadcast %cst_15 : f32 to vector<1x16xf32>
      %18 = arith.addf %15, %17 : vector<1x16xf32>
      %19 = math.sqrt %18 : vector<1x16xf32>
      %cst_16 = arith.constant 1.000000e+00 : f32
      %20 = vector.broadcast %cst_16 : f32 to vector<1x16xf32>
      %21 = arith.subf %20, %19 : vector<1x16xf32>
      %cst_17 = arith.constant 0.000000e+00 : f32
      %22 = vector.broadcast %cst_17 : f32 to vector<1x16xf32>
      %23 = arith.maximumf %21, %22 : vector<1x16xf32>
      %24 = arith.mulf %16, %15 : vector<1x16xf32>
      %cst_18 = arith.constant 1.000000e+00 : f32
      %25 = vector.broadcast %cst_18 : f32 to vector<1x16xf32>
      %26 = arith.subf %25, %16 : vector<1x16xf32>
      %27 = arith.mulf %26, %23 : vector<1x16xf32>
      %28 = arith.mulf %27, %23 : vector<1x16xf32>
      %29 = arith.addf %24, %28 : vector<1x16xf32>
      %cst_19 = arith.constant 5.000000e-01 : f32
      %30 = vector.broadcast %cst_19 : f32 to vector<1x16xf32>
      %31 = arith.mulf %30, %29 : vector<1x16xf32>
      %c0_20 = arith.constant 0 : index
      %c0_21 = arith.constant 0 : index
      %32 = vector.load %arg5[%c0_20, %c0_21] : memref<1x16xf32, #tpu.memory_space<vmem>>, vector<1x16xf32>
      tpu.vector_store %arg5[%c0_20, %c0_21], %31 {strides = array<i32>} : memref<1x16xf32, #tpu.memory_space<vmem>>, vector<1x16xf32>,
    } else {
    }
    return
  }
  func.func @transform_0(%arg0: i32, %arg1: i32) -> (i32, i32) {
    %c0_i32 = arith.constant 0 : i32
    return %arg0, %arg1 : i32, i32
  }
  func.func @transform_1(%arg0: i32, %arg1: i32) -> (i32, i32) {
    %c0_i32 = arith.constant 0 : i32
    return %arg0, %arg1 : i32, i32
  }
  func.func @transform_2(%arg0: i32, %arg1: i32) -> (i32, i32) {
    %c0_i32 = arith.constant 0 : i32
    %c0_i32_0 = arith.constant 0 : i32
    return %c0_i32, %arg0 : i32, i32
  }
  func.func @transform_3(%arg0: i32, %arg1: i32) -> (i32, i32) {
    %c0_i32 = arith.constant 0 : i32
    %c0_i32_0 = arith.constant 0 : i32
    return %c0_i32, %arg0 : i32, i32
  }
}

</mosaic_0001>

<llo_original>
// kernel: tpu_custom_call.1
$region0: #{tpu_custom_call.1}
  #allocation0 [shape = 'u32[]', space=smem, size = 0x4, offset = 0x4, fixed_abs, tag = 'smem constant byte address 0x4 - core index']
  #allocation1 [shape = 'u32[72,128]{1,0:T(1,128)}', space=vmem, size = 0x9000, scoped, tag = 'internal scratch']
  #allocation2 [shape = 'f32[1,16]{1,0:T(1,128)}', space=vmem, size = 0x200, scoped, tag = 'scratch operand']
  %s0 = inlined_call_operand.hbm [shape: f32[16,32], index: 0, kind: input, shape index: {}]
  %s1 = inlined_call_operand.hbm [shape: f32[16,32], index: 1, kind: input, shape index: {}]
  %s2 = inlined_call_operand.vmem [shape: f32[1,16], index: 2, kind: input, shape index: {}]
  %s3 = inlined_call_operand.hbm [shape: f32[1,16], index: 3, kind: output, shape index: {}]
  %s4 = sld [smem:[#allocation0]]
  $region38: #{tpu_custom_call.1} parent=0
    _
  %s6 = ssub.s32 1, %s4
  %s7 = scalar_select 0, %s6, %s4
  $region1: #{tpu_custom_call.1} parent=0
    #allocation3 [shape = 'u8[8192]{0}', space=vmem, size = 0x2000, scoped, tag = 'input window, operand 0, single buffered']
    #allocation4 [shape = 's32[1]{0}', space=sflag, size = 0x4, scoped, tag = 'scoped memory for tpu_custom_call.1']
    #allocation5 [shape = 's32[1]{0}', space=sflag, size = 0x4, scoped, tag = 'scoped memory for tpu_custom_call.1']
    #allocation6 [shape = 'u8[8192]{0}', space=vmem, size = 0x2000, scoped, tag = 'input window, operand 1, single buffered']
    #allocation7 [shape = 's32[1]{0}', space=sflag, size = 0x4, scoped, tag = 'scoped memory for tpu_custom_call.1']
    #allocation8 [shape = 'u8[512]{0}', space=vmem, size = 0x400, scoped, tag = 'output window, operand 0, single buffered']
    %8 = vsyncpa [#allocation4], 0
    %9 = vsyncpa [#allocation7], 0
    %10 = vsyncpa [#allocation5], 0
    // Predicated region
    $region2: #{tpu_custom_call.1} parent=1 // pred_check
      _
    $region3: #{tpu_custom_call.1} parent=1 // pred_check_branch
      %12 = sbr.rel (0) target = $region5
    $region4: #{tpu_custom_call.1} parent=1 // pred_region
      %14 = vsyncadd [#allocation4], 0
      %s15 = sshll.u32 %s0, 4
      %s16 = int_to_ptr.hbm [resolvable:$true] %s15
      %s17 = sshll.u32 [#allocation3], 4
      %s18 = int_to_ptr.vmem [resolvable:$true] %s17
      %23 = dma.hbm_to_vmem [thread:$0]  %s16, 256, %s18, [#allocation4], 128, 128, 8
    $region5: #{tpu_custom_call.1} parent=1 // pred_fallthru
      _
    // Predicated region
    $region6: #{tpu_custom_call.1} parent=1 // pred_check
      _
    $region7: #{tpu_custom_call.1} parent=1 // pred_check_branch
      %25 = sbr.rel (0) target = $region9
    $region8: #{tpu_custom_call.1} parent=1 // pred_region
      %27 = vsyncadd [#allocation7], 0
      %s28 = sshll.u32 %s1, 4
      %s29 = int_to_ptr.hbm [resolvable:$true] %s28
      %s30 = sshll.u32 [#allocation6], 4
      %s31 = int_to_ptr.vmem [resolvable:$true] %s30
      %36 = dma.hbm_to_vmem [thread:$0]  %s29, 256, %s31, [#allocation7], 128, 128, 8
    $region9: #{tpu_custom_call.1} parent=1 // pred_fallthru
      _
    // Predicated region
    $region10: #{tpu_custom_call.1} parent=1 // pred_check
      _
    $region11: #{tpu_custom_call.1} parent=1 // pred_check_branch
      %38 = sbr.rel (0) target = $region13
    $region12: #{tpu_custom_call.1} parent=1 // pred_region
      _
    $region13: #{tpu_custom_call.1} parent=1 // pred_fallthru
      _
    // Predicated region
    $region14: #{tpu_custom_call.1} parent=1 // pred_check
      _
    $region15: #{tpu_custom_call.1} parent=1 // pred_check_branch
      %40 = sbr.rel (0) target = $region17
    $region16: #{tpu_custom_call.1} parent=1 // pred_region
      %42 = dma.done [#allocation4], 256
    $region17: #{tpu_custom_call.1} parent=1 // pred_fallthru
      _
    // Predicated region
    $region18: #{tpu_custom_call.1} parent=1 // pred_check
      _
    $region19: #{tpu_custom_call.1} parent=1 // pred_check_branch
      %44 = sbr.rel (0) target = $region21
    $region20: #{tpu_custom_call.1} parent=1 // pred_region
      %46 = dma.done [#allocation7], 256
    $region21: #{tpu_custom_call.1} parent=1 // pred_fallthru
      _
    %p47 = scmp.eq.s32.totalorder 0, 0
    // Predicated region
    $region22: #{tpu_custom_call.1} parent=1 // pred_check
      %p48 = pneg %p47
    $region23: #{tpu_custom_call.1} parent=1 // pred_check_branch
      %50 = sbr.rel (%p48) target = $region25
    $region24: #{tpu_custom_call.1} parent=1 // pred_region
      %vm51 = vcmask 122880
      %52 = vst.msk [vmem:[#allocation2] sm:$0x1] %vm51, 0.0
    $region25: #{tpu_custom_call.1} parent=1 // pred_fallthru
      _
    %v53 = vld [vmem:[#allocation6] sm:$0xff]
    %v54 = vld [vmem:[#allocation6 + $0x8] sm:$0xff]
    %v55 = vld [vmem:[#allocation3] sm:$0xff]
    %v56 = vld [vmem:[#allocation3 + $0x8] sm:$0xff]
    %v57 = vsub.f32 %v53, %v55
    %v58 = vsub.f32 %v54, %v56
    %v59 = vmul.f32 %v57, %v57
    %v60 = vmul.f32 %v58, %v58
    %v61 = vld [vmem:[#allocation2] sm:$0x1]
    %vm62 = vcmask 261120
    %v64 = vsel %vm62, 1.0, 0
    %v67 = vsel %vm62, %v59, 0
    %v70 = vsel %vm62, %v60, 0
    %72 = vmatpush.xpose.msra.mxu0 0.0
    %73 = vmatpush.xpose.msra.mxu0 0.0
    %74 = vmatpush.xpose.msra.mxu0 0.0
    %75 = vmatpush.xpose.msra.mxu0 0.0
    %76 = vmatpush.xpose.msra.mxu0 0.0
    %77 = vmatpush.xpose.msra.mxu0 0.0
    %78 = vmatpush.xpose.msra.mxu0 0.0
    %79 = vmatpush.xpose.msra.mxu0 0.0
    %80 = vmatpush.xpose.msra.mxu0 0.0
    %81 = vmatpush.xpose.msra.mxu0 0.0
    %82 = vmatpush.xpose.msra.mxu0 0.0
    %83 = vmatpush.xpose.msra.mxu0 0.0
    %84 = vmatpush.xpose.msra.mxu0 0.0
    %85 = vmatpush.xpose.msra.mxu0 0.0
    %86 = vmatpush.xpose.msra.mxu0 %v70
    %87 = vmatpush.xpose.msra.mxu0 %v67
    %88 = vmatmul.f32.gmra.mxu0 %v64
    %v89 = vpop.f32.mrf.mxu0
    %v90 = vadd.f32 0.0, %v89
    %91 = vdwg.mxu0
    %v92 = vadd.f32 %v61, %v90
    %vm93 = vcmask 122880
    %94 = vst.msk [vmem:[#allocation2] sm:$0x1] %vm93, %v92
    // Predicated region
    $region26: #{tpu_custom_call.1} parent=1 // pred_check
      %p95 = pneg %p47
    $region27: #{tpu_custom_call.1} parent=1 // pred_check_branch
      %97 = sbr.rel (%p95) target = $region29
    $region28: #{tpu_custom_call.1} parent=1 // pred_region
      %v98 = vld [vmem:[#allocation2] sm:$0x1]
      %v99 = vld [vmem:[%s2] sm:$0x1]
      %v100 = vadd.f32 %v98, 1e-09
      %v101 = vrsqrt.pop %v100
      %v102 = vmul.f32 %v101, %v100
      %v103 = vmul.f32 %v102, %v101
      %v104 = vmul.f32 0.5, %v103
      %v105 = vsub.f32 1.5, %v104
      %v106 = vmul.f32 %v101, %v105
      %v107 = vmul.f32 %v100, %v106
      %vm108 = vcmp.eq.f32.partialorder %v100, inf
      %v109 = vsel %vm108, %v100, %v107
      %vm110 = vcmp.eq.f32.partialorder %v100, 0.0
      %v111 = vand.u32 %v100, 2147483648
      %v112 = vsel %vm110, %v111, %v109
      %v113 = vsub.f32 1.0, %v112
      %v114 = vmax.f32 %v113, 0.0
      %v115 = vmul.f32 %v99, %v98
      %v116 = vsub.f32 1.0, %v99
      %v117 = vmul.f32 %v116, %v114
      %v118 = vmul.f32 %v117, %v114
      %v119 = vadd.f32 %v115, %v118
      %v120 = vmul.f32 %v119, 0.5
      %121 = vst.msk [vmem:[#allocation8] sm:$0x1] %vm93, %v120
    $region29: #{tpu_custom_call.1} parent=1 // pred_fallthru
      _
    // Predicated region
    $region30: #{tpu_custom_call.1} parent=1 // pred_check
      _
    $region31: #{tpu_custom_call.1} parent=1 // pred_check_branch
      %123 = sbr.rel (0) target = $region33
    $region32: #{tpu_custom_call.1} parent=1 // pred_region
      %125 = vsyncadd [#allocation5], 0
      %s127 = sshll.u32 [#allocation8], 4
      %s128 = int_to_ptr.vmem [resolvable:$true] %s127
      %s129 = sshll.u32 %s3, 4
      %s130 = int_to_ptr.hbm [resolvable:$true] %s129
      %132 = dma.vmem_to_hbm [thread:$0]  %s128, 16, %s130, [#allocation5]
    $region33: #{tpu_custom_call.1} parent=1 // pred_fallthru
      _
    // Predicated region
    $region34: #{tpu_custom_call.1} parent=1 // pred_check
      _
    $region35: #{tpu_custom_call.1} parent=1 // pred_check_branch
      %134 = sbr.rel (0) target = $region37
    $region36: #{tpu_custom_call.1} parent=1 // pred_region
      %136 = dma.done [#allocation5], 16
    $region37: #{tpu_custom_call.1} parent=1 // pred_fallthru
      _
    %137 = vsyncpa [#allocation4], 1
    %138 = vsyncpa [#allocation7], 1
    %139 = vsyncpa [#allocation5], 1

</llo_original>
